<compile_context>
chip_gen: v7x
topology: tpu7x:2x2x1
jax: 0.10.0
libtpu: 0.0.40
codegen_flags: <defaults>
</compile_context>

<pallas_src>
import functools

import jax
import jax.numpy as jnp
from jax import lax
from jax.experimental import pallas as pl
from jax.experimental.pallas import tpu as pltpu


def _round_up(x, m):
    return ((x + m - 1) // m) * m


def _sublane_multiple(dtype):
    size = jnp.dtype(dtype).itemsize
    if size >= 4:
        return 8
    if size == 2:
        return 16
    return 32


def _largest_tile(dim, cap, step=128):
    """Largest multiple of `step` dividing `dim`, capped at `cap`.

    Falls back to the full `dim` when it is not lane-aligned (small dims);
    blocks equal to the full array dim are always legal."""
    if dim % step != 0 or dim <= cap:
        return dim
    for cand in range(cap - (cap % step), step - 1, -step):
        if dim % cand == 0:
            return cand
    return step  # unreachable: `step` always divides `dim` here


def _gelu_tanh(x):
    # tanh-approximate GELU (HF "gelu_new"); tanh runs on the EUP slot.
    c = 0.7978845608028654  # sqrt(2/pi)
    return 0.5 * x * (1.0 + jnp.tanh(c * (x + 0.044715 * x * x * x)))


def _fc_kernel(x_ref, w_ref, b_ref, g_ref, beta_ref, o_ref, acc_ref, *,
               eps, inv_d_out, tn):
    """One (row, K, N) grid step of dense -> gelu -> layernorm.

    Grid axes: (row tiles, K reduction tiles, output-column tiles).
    acc_ref is a full-width (tm, d_out) f32 accumulator resident for a whole
    row tile; W streams in (tn, tk) blocks in its native (D_out, D_in) layout.
    """
    k = pl.program_id(1)
    j = pl.program_id(2)

    @pl.when((k == 0) & (j == 0))
    def _():
        acc_ref[...] = jnp.zeros_like(acc_ref)

    # x: (tm, tk), w: (tn, tk) -> contract both on their last axis (no transpose).
    partial = lax.dot_general(
        x_ref[...], w_ref[...],
        dimension_numbers=(((1,), (1,)), ((), ())),
        preferred_element_type=jnp.float32)

    if tn == acc_ref.shape[-1]:          # single N tile: no dynamic lane slice
        acc_ref[...] += partial
    else:
        col = pl.multiple_of(j * tn, tn)
        acc_ref[:, pl.ds(col, tn)] += partial

    @pl.when((k == pl.num_programs(1) - 1) & (j == pl.num_programs(2) - 1))
    def _():
        y = _gelu_tanh(acc_ref[...] + b_ref[...].astype(jnp.float32))
        # One-pass mean / mean-of-squares keeps live (tm, d_out) temporaries low.
        mean = jnp.sum(y, axis=-1, keepdims=True) * inv_d_out
        ex2 = jnp.sum(y * y, axis=-1, keepdims=True) * inv_d_out
        var = jnp.maximum(ex2 - mean * mean, 0.0)
        r = lax.rsqrt(var + eps)
        out = (y - mean) * (r * g_ref[...].astype(jnp.float32))
        out = out + beta_ref[...].astype(jnp.float32)
        # TODO(synk): training-mode dropout (pltpu.prng_seed + prng_random_bits)
        # is omitted; eval-mode dropout is the identity.
        o_ref[...] = out.astype(o_ref.dtype)


def fully_connected_layer(x, w, b, gamma, beta, *, eps=1e-12,
                          row_tile=512, k_tile=512, n_tile=1024,
                          vmem_budget_bytes=48 << 20):
    """x: [..., D_in]; w: [D_out, D_in] (PyTorch layout, used as-is); b/gamma/beta: [D_out].

    Pass x / w already in bfloat16 to stream matmul operands at the MXU's native
    bf16 rate (accumulation stays f32); no per-call casts/copies of W are made here.
    """
    orig_shape = x.shape
    d_in = orig_shape[-1]
    d_out, d_in_w = w.shape
    assert d_in_w == d_in, (w.shape, d_in)

    x2 = x.reshape(-1, d_in)
    n = x2.shape[0]

    xb = jnp.dtype(x2.dtype).itemsize
    wb = jnp.dtype(w.dtype).itemsize
    ob = xb
    sub = _sublane_multiple(x2.dtype)

    # K / N tiles: largest lane-aligned divisors (no tk=d_in collapse for big dims).
    tk = _largest_tile(d_in, k_tile)
    tn = _largest_tile(d_out, n_tile)

    # Row tile: as large as the VMEM budget allows (weight-byte reuse), but at
    # least two tiles so both v7x TensorCores get row work on small batches.
    tm = min(_round_up(row_tile, sub), _round_up(n, sub))
    if _round_up(n, tm) // tm < 2 and n > sub:
        tm = _round_up((n + 1) // 2, sub)
    tm = max(tm, sub)

    def footprint(tm_):
        return (2 * tm_ * tk * xb          # double-buffered x tile
                + 2 * tn * tk * wb         # double-buffered W tile
                + 2 * tm_ * d_out * ob     # double-buffered output tile
                + tm_ * d_out * 4          # f32 accumulator scratch
                + 2 * 3 * d_out * 4)       # bias / gamma / beta

    while footprint(tm) > vmem_budget_bytes and tm > sub:
        tm = max(sub, _round_up(tm // 2, sub))

    n_pad = _round_up(n, tm)
    if n_pad != n:
        x2 = jnp.pad(x2, ((0, n_pad - n), (0, 0)))

    b2 = jnp.asarray(b).reshape(1, d_out)
    g2 = jnp.asarray(gamma).reshape(1, d_out)
    beta2 = jnp.asarray(beta).reshape(1, d_out)

    grid = (n_pad // tm, d_in // tk, d_out // tn)
    vmem_limit = int(min(max(footprint(tm) * 5 // 4 + (2 << 20), 32 << 20),
                         96 << 20))

    kernel = functools.partial(_fc_kernel, eps=float(eps),
                               inv_d_out=1.0 / d_out, tn=tn)

    out = pl.pallas_call(
        kernel,
        out_shape=jax.ShapeDtypeStruct((n_pad, d_out), x.dtype),
        grid_spec=pltpu.PrefetchScalarGridSpec(
            num_scalar_prefetch=0,
            grid=grid,
            in_specs=[
                pl.BlockSpec((tm, tk), lambda i, k, j: (i, k)),      # x tile
                pl.BlockSpec((tn, tk), lambda i, k, j: (j, k)),      # W tile (native layout)
                pl.BlockSpec((1, d_out), lambda i, k, j: (0, 0)),    # bias
                pl.BlockSpec((1, d_out), lambda i, k, j: (0, 0)),    # LN gamma
                pl.BlockSpec((1, d_out), lambda i, k, j: (0, 0)),    # LN beta
            ],
            out_specs=pl.BlockSpec((tm, d_out), lambda i, k, j: (i, 0)),
            scratch_shapes=[pltpu.VMEM((tm, d_out), jnp.float32)],
        ),
        compiler_params=pltpu.CompilerParams(
            dimension_semantics=("parallel", "arbitrary", "arbitrary"),
            vmem_limit_bytes=vmem_limit,
        ),
    )(x2, w, b2, g2, beta2)

    out = out[:n]
    return out.reshape(orig_shape[:-1] + (d_out,))


def fully_connected_ref(x, w, b, gamma, beta, *, eps=1e-12):
    """Pure-JAX reference with identical semantics (for verification)."""
    y = jnp.dot(
        x.astype(jnp.float32), jnp.asarray(w).T.astype(jnp.float32),
        precision=jax.lax.Precision.HIGHEST,
    ) + b.astype(jnp.float32)
    y = _gelu_tanh(y)
    mean = jnp.mean(y, axis=-1, keepdims=True)
    var = jnp.mean(jnp.square(y - mean), axis=-1, keepdims=True)
    y = (y - mean) * jax.lax.rsqrt(var + eps)
    y = y * gamma.astype(jnp.float32) + beta.astype(jnp.float32)
    return y.astype(x.dtype)


if __name__ == "__main__":
    key = jax.random.PRNGKey(0)
    B, S, D_IN, D_OUT = 2, 8, 32, 32
    kx, kw, kb, kg, kbt = jax.random.split(key, 5)

    x = jax.random.normal(kx, (B, S, D_IN), dtype=jnp.float32)
    lim = 1.0 / (D_IN ** 0.5)
    w = jax.random.uniform(kw, (D_OUT, D_IN), minval=-lim, maxval=lim,
                           dtype=jnp.float32)
    b = jax.random.uniform(kb, (D_OUT,), minval=-lim, maxval=lim,
                           dtype=jnp.float32)
    gamma = 1.0 + 0.1 * jax.random.normal(kg, (D_OUT,), dtype=jnp.float32)
    beta = 0.1 * jax.random.normal(kbt, (D_OUT,), dtype=jnp.float32)

    # f32 path: tight correctness check against the f32 reference.
    out = fully_connected_layer(x, w, b, gamma, beta, eps=1e-12)
    out = jax.block_until_ready(out)
    ref = fully_connected_ref(x, w, b, gamma, beta, eps=1e-12)
    assert out.shape == ref.shape, (out.shape, ref.shape)
    max_err = float(jnp.max(jnp.abs(out.astype(jnp.float32) -
                                    ref.astype(jnp.float32))))
    assert jnp.allclose(out, ref, rtol=1e-2, atol=1e-2), max_err

    # bf16 streaming path (native MXU bf16 operands, f32 accumulation): smoke
    # test with a loose tolerance against the bf16-quantized-input reference.
    x_bf = x.astype(jnp.bfloat16)
    w_bf = w.astype(jnp.bfloat16)
    out_bf = fully_connected_layer(x_bf, w_bf, b, gamma, beta, eps=1e-12)
    out_bf = jax.block_until_ready(out_bf)
    ref_bf = fully_connected_ref(x_bf, w_bf, b, gamma, beta, eps=1e-12)
    assert out_bf.shape == ref_bf.shape, (out_bf.shape, ref_bf.shape)
    max_err_bf = float(jnp.max(jnp.abs(out_bf.astype(jnp.float32) -
                                       ref_bf.astype(jnp.float32))))
    assert max_err_bf < 0.1, max_err_bf

    print("KERNEL_OK")
</pallas_src>

<mosaic_0001>
module attributes {stable_mosaic.version = 11 : i64} {
  func.func @_fc_kernel(%arg0: i32, %arg1: i32, %arg2: i32, %arg3: memref<8x32xf32, #tpu.memory_space<vmem>>, %arg4: memref<32x32xf32, #tpu.memory_space<vmem>>, %arg5: memref<1x32xf32, #tpu.memory_space<vmem>>, %arg6: memref<1x32xf32, #tpu.memory_space<vmem>>, %arg7: memref<1x32xf32, #tpu.memory_space<vmem>>, %arg8: memref<8x32xf32, #tpu.memory_space<vmem>>, %arg9: memref<8x32xf32, #tpu.memory_space<vmem>>) attributes {dimension_semantics = [#tpu.dimension_semantics<parallel>, #tpu.dimension_semantics<arbitrary>, #tpu.dimension_semantics<arbitrary>], iteration_bounds = array<i64: 2, 1, 1>, scalar_prefetch = 0 : i64, scratch_operands = 1 : i64, tpu.core_type = #tpu.core_type<tc>, window_params = [{transform_indices = @transform_0, window_bounds = array<i64: 8, 32>}, {transform_indices = @transform_1, window_bounds = array<i64: 32, 32>}, {pipeline_mode = #tpu.pipeline_mode<synchronous>, transform_indices = @transform_2, window_bounds = array<i64: 1, 32>}, {pipeline_mode = #tpu.pipeline_mode<synchronous>, transform_indices = @transform_3, window_bounds = array<i64: 1, 32>}, {pipeline_mode = #tpu.pipeline_mode<synchronous>, transform_indices = @transform_4, window_bounds = array<i64: 1, 32>}, {transform_indices = @transform_5, window_bounds = array<i64: 8, 32>}]} {
    %c0_i32 = arith.constant 0 : i32
    %0 = arith.cmpi eq, %arg1, %c0_i32 : i32
    %c0_i32_0 = arith.constant 0 : i32
    %1 = arith.cmpi eq, %arg2, %c0_i32_0 : i32
    %2 = arith.andi %0, %1 : i1
    %3 = arith.extui %2 : i1 to i32
    %c0_i32_1 = arith.constant 0 : i32
    %4 = arith.cmpi ne, %3, %c0_i32_1 : i32
    scf.if %4 {
      %cst_12 = arith.constant 0.000000e+00 : f32
      %16 = vector.broadcast %cst_12 : f32 to vector<8x32xf32>
      %c0_13 = arith.constant 0 : index
      %c0_14 = arith.constant 0 : index
      %17 = vector.load %arg9[%c0_13, %c0_14] : memref<8x32xf32, #tpu.memory_space<vmem>>, vector<8x32xf32>
      tpu.vector_store %arg9[%c0_13, %c0_14], %16 {strides = array<i32>} : memref<8x32xf32, #tpu.memory_space<vmem>>, vector<8x32xf32>,
    } else {
    }
    %c0 = arith.constant 0 : index
    %c0_2 = arith.constant 0 : index
    %5 = vector.load %arg3[%c0, %c0_2] : memref<8x32xf32, #tpu.memory_space<vmem>>, vector<8x32xf32>
    %c0_3 = arith.constant 0 : index
    %c0_4 = arith.constant 0 : index
    %6 = vector.load %arg4[%c0_3, %c0_4] : memref<32x32xf32, #tpu.memory_space<vmem>>, vector<32x32xf32>
    %cst = arith.constant dense<0.000000e+00> : vector<8x32xf32>
    %7 = tpu.matmul %5, %6, %cst {dimension_numbers = #tpu.dot_dimension_numbers<[1], [1], [0], [0], [0, 0, 1, 0], [], []>} : vector<8x32xf32>, vector<32x32xf32>, vector<8x32xf32> -> vector<8x32xf32>
    %c0_5 = arith.constant 0 : index
    %c0_6 = arith.constant 0 : index
    %8 = vector.load %arg9[%c0_5, %c0_6] : memref<8x32xf32, #tpu.memory_space<vmem>>, vector<8x32xf32>
    %9 = arith.addf %8, %7 : vector<8x32xf32>
    %c0_7 = arith.constant 0 : index
    %c0_8 = arith.constant 0 : index
    %10 = vector.load %arg9[%c0_7, %c0_8] : memref<8x32xf32, #tpu.memory_space<vmem>>, vector<8x32xf32>
    tpu.vector_store %arg9[%c0_7, %c0_8], %9 {strides = array<i32>} : memref<8x32xf32, #tpu.memory_space<vmem>>, vector<8x32xf32>,
    %c0_i32_9 = arith.constant 0 : i32
    %11 = arith.cmpi eq, %arg1, %c0_i32_9 : i32
    %c0_i32_10 = arith.constant 0 : i32
    %12 = arith.cmpi eq, %arg2, %c0_i32_10 : i32
    %13 = arith.andi %11, %12 : i1
    %14 = arith.extui %13 : i1 to i32
    %c0_i32_11 = arith.constant 0 : i32
    %15 = arith.cmpi ne, %14, %c0_i32_11 : i32
    scf.if %15 {
      %c0_12 = arith.constant 0 : index
      %c0_13 = arith.constant 0 : index
      %16 = vector.load %arg9[%c0_12, %c0_13] : memref<8x32xf32, #tpu.memory_space<vmem>>, vector<8x32xf32>
      %c0_14 = arith.constant 0 : index
      %c0_15 = arith.constant 0 : index
      %17 = vector.load %arg5[%c0_14, %c0_15] : memref<1x32xf32, #tpu.memory_space<vmem>>, vector<1x32xf32>
      %18 = vector.broadcast %17 : vector<1x32xf32> to vector<8x32xf32>
      %19 = arith.addf %16, %18 : vector<8x32xf32>
      %cst_16 = arith.constant 5.000000e-01 : f32
      %20 = vector.broadcast %cst_16 : f32 to vector<8x32xf32>
      %21 = arith.mulf %20, %19 : vector<8x32xf32>
      %cst_17 = arith.constant 4.471500e-02 : f32
      %22 = vector.broadcast %cst_17 : f32 to vector<8x32xf32>
      %23 = arith.mulf %22, %19 : vector<8x32xf32>
      %24 = arith.mulf %23, %19 : vector<8x32xf32>
      %25 = arith.mulf %24, %19 : vector<8x32xf32>
      %26 = arith.addf %19, %25 : vector<8x32xf32>
      %cst_18 = arith.constant 0.797884583 : f32
      %27 = vector.broadcast %cst_18 : f32 to vector<8x32xf32>
      %28 = arith.mulf %27, %26 : vector<8x32xf32>
      %29 = math.tanh %28 : vector<8x32xf32>
      %cst_19 = arith.constant 1.000000e+00 : f32
      %30 = vector.broadcast %cst_19 : f32 to vector<8x32xf32>
      %31 = arith.addf %30, %29 : vector<8x32xf32>
      %32 = arith.mulf %21, %31 : vector<8x32xf32>
      %cst_20 = arith.constant dense<0.000000e+00> : vector<8xf32>
      %33 = vector.multi_reduction <add>, %32, %cst_20 [1] : vector<8x32xf32> to vector<8xf32>
      %34 = vector.shape_cast %33 : vector<8xf32> to vector<8x1xf32>
      %cst_21 = arith.constant 3.125000e-02 : f32
      %35 = vector.broadcast %cst_21 : f32 to vector<8x1xf32>
      %36 = arith.mulf %34, %35 : vector<8x1xf32>
      %37 = arith.mulf %32, %32 : vector<8x32xf32>
      %cst_22 = arith.constant dense<0.000000e+00> : vector<8xf32>
      %38 = vector.multi_reduction <add>, %37, %cst_22 [1] : vector<8x32xf32> to vector<8xf32>
      %39 = vector.shape_cast %38 : vector<8xf32> to vector<8x1xf32>
      %cst_23 = arith.constant 3.125000e-02 : f32
      %40 = vector.broadcast %cst_23 : f32 to vector<8x1xf32>
      %41 = arith.mulf %39, %40 : vector<8x1xf32>
      %42 = arith.mulf %36, %36 : vector<8x1xf32>
      %43 = arith.subf %41, %42 : vector<8x1xf32>
      %cst_24 = arith.constant 0.000000e+00 : f32
      %44 = vector.broadcast %cst_24 : f32 to vector<8x1xf32>
      %45 = arith.maximumf %43, %44 : vector<8x1xf32>
      %cst_25 = arith.constant 9.99999996E-13 : f32
      %46 = vector.broadcast %cst_25 : f32 to vector<8x1xf32>
      %47 = arith.addf %45, %46 : vector<8x1xf32>
      %48 = math.rsqrt %47 : vector<8x1xf32>
      %49 = vector.broadcast %36 : vector<8x1xf32> to vector<8x32xf32>
      %50 = arith.subf %32, %49 : vector<8x32xf32>
      %c0_26 = arith.constant 0 : index
      %c0_27 = arith.constant 0 : index
      %51 = vector.load %arg6[%c0_26, %c0_27] : memref<1x32xf32, #tpu.memory_space<vmem>>, vector<1x32xf32>
      %52 = vector.broadcast %48 : vector<8x1xf32> to vector<8x32xf32>
      %53 = vector.broadcast %51 : vector<1x32xf32> to vector<8x32xf32>
      %54 = arith.mulf %52, %53 : vector<8x32xf32>
      %55 = arith.mulf %50, %54 : vector<8x32xf32>
      %c0_28 = arith.constant 0 : index
      %c0_29 = arith.constant 0 : index
      %56 = vector.load %arg7[%c0_28, %c0_29] : memref<1x32xf32, #tpu.memory_space<vmem>>, vector<1x32xf32>
      %57 = vector.broadcast %56 : vector<1x32xf32> to vector<8x32xf32>
      %58 = arith.addf %55, %57 : vector<8x32xf32>
      %c0_30 = arith.constant 0 : index
      %c0_31 = arith.constant 0 : index
      %59 = vector.load %arg8[%c0_30, %c0_31] : memref<8x32xf32, #tpu.memory_space<vmem>>, vector<8x32xf32>
      tpu.vector_store %arg8[%c0_30, %c0_31], %58 {strides = array<i32>} : memref<8x32xf32, #tpu.memory_space<vmem>>, vector<8x32xf32>,
    } else {
    }
    return
  }
  func.func @transform_0(%arg0: i32, %arg1: i32, %arg2: i32) -> (i32, i32) {
    %c0_i32 = arith.constant 0 : i32
    return %arg0, %arg1 : i32, i32
  }
  func.func @transform_1(%arg0: i32, %arg1: i32, %arg2: i32) -> (i32, i32) {
    %c0_i32 = arith.constant 0 : i32
    return %arg2, %arg1 : i32, i32
  }
  func.func @transform_2(%arg0: i32, %arg1: i32, %arg2: i32) -> (i32, i32) {
    %c0_i32 = arith.constant 0 : i32
    %c0_i32_0 = arith.constant 0 : i32
    %c0_i32_1 = arith.constant 0 : i32
    return %c0_i32, %c0_i32_0 : i32, i32
  }
  func.func @transform_3(%arg0: i32, %arg1: i32, %arg2: i32) -> (i32, i32) {
    %c0_i32 = arith.constant 0 : i32
    %c0_i32_0 = arith.constant 0 : i32
    %c0_i32_1 = arith.constant 0 : i32
    return %c0_i32, %c0_i32_0 : i32, i32
  }
  func.func @transform_4(%arg0: i32, %arg1: i32, %arg2: i32) -> (i32, i32) {
    %c0_i32 = arith.constant 0 : i32
    %c0_i32_0 = arith.constant 0 : i32
    %c0_i32_1 = arith.constant 0 : i32
    return %c0_i32, %c0_i32_0 : i32, i32
  }
  func.func @transform_5(%arg0: i32, %arg1: i32, %arg2: i32) -> (i32, i32) {
    %c0_i32 = arith.constant 0 : i32
    %c0_i32_0 = arith.constant 0 : i32
    return %arg0, %c0_i32 : i32, i32
  }
}

</mosaic_0001>

<llo_original>
// kernel: tpu_custom_call.1
$region0: #{tpu_custom_call.1}
  #allocation0 [shape = 'u32[]', space=smem, size = 0x4, offset = 0x4, fixed_abs, tag = 'smem constant byte address 0x4 - core index']
  #allocation1 [shape = 'u32[144,128]{1,0:T(1,128)}', space=vmem, size = 0x12000, scoped, tag = 'internal scratch']
  #allocation2 [shape = 'f32[8,32]{1,0:T(8,128)}', space=vmem, size = 0x1000, scoped, tag = 'scratch operand']
  %s0 = inlined_call_operand.hbm [shape: f32[16,32], index: 0, kind: input, shape index: {}]
  %s1 = inlined_call_operand.hbm [shape: f32[32,32], index: 1, kind: input, shape index: {}]
  %s2 = inlined_call_operand.vmem [shape: f32[1,32], index: 2, kind: input, shape index: {}]
  %s3 = inlined_call_operand.vmem [shape: f32[1,32], index: 3, kind: input, shape index: {}]
  %s4 = inlined_call_operand.vmem [shape: f32[1,32], index: 4, kind: input, shape index: {}]
  %s5 = inlined_call_operand.hbm [shape: f32[16,32], index: 5, kind: output, shape index: {}]
  %s6 = sld [smem:[#allocation0]]
  $region69: #{tpu_custom_call.1} parent=0
    _
  %s8 = ssub.s32 1, %s6
  %s9 = scalar_select 0, %s8, %s6
  $region1: #{tpu_custom_call.1} parent=0
    #allocation3 [shape = 'u8[8192]{0}', space=vmem, size = 0x2000, scoped, tag = 'input window, operand 0']
    #allocation4 [shape = 's32[2]{0}', space=sflag, size = 0x8, scoped, tag = 'scoped memory for tpu_custom_call.1']
    #allocation5 [shape = 's32[2]{0}', space=sflag, size = 0x8, scoped, tag = 'scoped memory for tpu_custom_call.1']
    #allocation6 [shape = 'u8[16384]{0}', space=vmem, size = 0x4000, scoped, tag = 'input window, operand 1, single buffered']
    #allocation7 [shape = 's32[1]{0}', space=sflag, size = 0x4, scoped, tag = 'scoped memory for tpu_custom_call.1']
    #allocation8 [shape = 'u8[8192]{0}', space=vmem, size = 0x2000, scoped, tag = 'output window, operand 0']
    %10 = vsyncpa [#allocation4], 0
    %s11 = scalar_lea.sflag [#allocation4], 1
    %12 = vsyncpa %s11, 0
    %13 = vsyncpa [#allocation7], 0
    %14 = vsyncpa [#allocation5], 0
    %s15 = scalar_lea.sflag [#allocation5], 1
    %16 = vsyncpa %s15, 0
    loop: start=0, step=1, limit=4
    $region2: #{tpu_custom_call.1} parent=1 // loop_pre_header
      _
    $region3: #{tpu_custom_call.1} parent=1 // loop_header
      %s18 = sphi 0, %s22
      %p19 = scmp.ge.s32.totalorder %s18, 4
      %s25 = sphi 0, %s44
      %s26 = sphi 0, %s40
      %s27 = sphi 0, %s36
      %s28 = sphi 0, %s25
      %s29 = sphi 0, %s26
      %s30 = sphi 0, %s27
      %s31 = sphi 0, %s28
      %s32 = sphi 0, %s29
      %s33 = sphi 0, %s30
      %s49 = sphi 0, %s51
      %s52 = sphi 0, %s49
      %s53 = sphi 0, %s52
      %s69 = sphi 0, %s53
      %s77 = sphi 0, %s79
      %s80 = sphi 0, %s77
      %s81 = sphi 0, %s80
      %s97 = sphi 0, %s81
      %s101 = sphi 0, %s101
      %s103 = sphi 0, %s101
      %s104 = sphi 0, %s103
      %s118 = sphi 0, %s104
      %s122 = sphi 0, %s122
      %s124 = sphi 0, %s122
      %s125 = sphi 0, %s124
      %s139 = sphi 0, %s125
      %s143 = sphi 0, %s143
      %s145 = sphi 0, %s143
      %s146 = sphi 0, %s145
      %s160 = sphi 0, %s146
      %s166 = sphi 0, %s168
      %s169 = sphi 0, %s166
      %s170 = sphi 0, %s169
      %s186 = sphi 0, %s170
    $region4: #{tpu_custom_call.1} parent=1 // loop_header_branch
      %21 = sbr.rel (%p19) target = $region8
    $region5: #{tpu_custom_call.1} parent=1 // loop_body
      %s23 = ssub.s32 %s18, 1
      %s24 = ssub.s32 %s18, 2
      %s34 = sadd.s32 1, %s27
      %p35 = scmp.ge.s32.totalorder %s34, 1
      %s36 = scalar_select %p35, 0, %s34
      %s37 = sadd.s32 1, %s26
      %s38 = scalar_select %p35, %s37, %s26
      %p39 = scmp.ge.s32.totalorder %s38, 1
      %s40 = scalar_select %p39, 0, %s38
      %s41 = sadd.s32 1, %s25
      %s42 = scalar_select %p39, %s41, %s25
      %p43 = scmp.ge.s32.totalorder %s42, 2
      %s44 = scalar_select %p43, 0, %s42
      %s45 = ssub.s32 %s25, %s44
      %s46 = ssub.s32 %s26, %s40
      %s47 = sor.u32 %s45, %s46
      %p48 = scmp.eq.s32.totalorder %s47, 0
      %s50 = sadd.s32 %s49, 1
      %s51 = scalar_select %p48, %s49, %s50
      %p54 = pneg %p48
      %p55 = scmp.eq.s32.totalorder %s18, 1
      %p56 = por %p54, %p55
      %p57 = scmp.ne.s32.totalorder %s49, %s52
      %p58 = scmp.eq.s32.totalorder %s18, 0
      %p59 = por %p57, %p58
      %p60 = scmp.ne.s32.totalorder %s49, %s52
      %p61 = scmp.eq.s32.totalorder %s23, 1
      %p62 = por %p60, %p61
      %p63 = scmp.ne.s32.totalorder %s52, %s53
      %p64 = scmp.eq.s32.totalorder %s23, 0
      %p65 = por %p63, %p64
      %p66 = scmp.ne.s32.totalorder %s52, %s53
      %p67 = scmp.eq.s32.totalorder %s24, 1
      %p68 = por %p66, %p67
      %p70 = scmp.ne.s32.totalorder %s53, %s69
      %p71 = scmp.eq.s32.totalorder %s24, 0
      %p72 = por %p70, %p71
      %s73 = ssub.s32 %s27, %s36
      %s74 = ssub.s32 %s26, %s40
      %s75 = sor.u32 %s73, %s74
      %p76 = scmp.eq.s32.totalorder %s75, 0
      %s78 = sadd.s32 %s77, 1
      %s79 = scalar_select %p76, %s77, %s78
      %p82 = pneg %p76
      %p83 = scmp.eq.s32.totalorder %s18, 1
      %p84 = por %p82, %p83
      %p85 = scmp.ne.s32.totalorder %s77, %s80
      %p86 = scmp.eq.s32.totalorder %s18, 0
      %p87 = por %p85, %p86
      %p88 = scmp.ne.s32.totalorder %s77, %s80
      %p89 = scmp.eq.s32.totalorder %s23, 1
      %p90 = por %p88, %p89
      %p91 = scmp.ne.s32.totalorder %s80, %s81
      %p92 = scmp.eq.s32.totalorder %s23, 0
      %p93 = por %p91, %p92
      %p94 = scmp.ne.s32.totalorder %s80, %s81
      %p95 = scmp.eq.s32.totalorder %s24, 1
      %p96 = por %p94, %p95
      %p98 = scmp.ne.s32.totalorder %s81, %s97
      %p99 = scmp.eq.s32.totalorder %s24, 0
      %p100 = por %p98, %p99
      %s102 = sadd.s32 %s101, 1
      %p105 = scmp.eq.s32.totalorder %s18, 1
      %p106 = scmp.ne.s32.totalorder %s101, %s103
      %p107 = scmp.eq.s32.totalorder %s18, 0
      %p108 = por %p106, %p107
      %p109 = scmp.ne.s32.totalorder %s101, %s103
      %p110 = scmp.eq.s32.totalorder %s23, 1
      %p111 = por %p109, %p110
      %p112 = scmp.ne.s32.totalorder %s103, %s104
      %p113 = scmp.eq.s32.totalorder %s23, 0
      %p114 = por %p112, %p113
      %p115 = scmp.ne.s32.totalorder %s103, %s104
      %p116 = scmp.eq.s32.totalorder %s24, 1
      %p117 = por %p115, %p116
      %p119 = scmp.ne.s32.totalorder %s104, %s118
      %p120 = scmp.eq.s32.totalorder %s24, 0
      %p121 = por %p119, %p120
      %s123 = sadd.s32 %s122, 1
      %p126 = scmp.eq.s32.totalorder %s18, 1
      %p127 = scmp.ne.s32.totalorder %s122, %s124
      %p128 = scmp.eq.s32.totalorder %s18, 0
      %p129 = por %p127, %p128
      %p130 = scmp.ne.s32.totalorder %s122, %s124
      %p131 = scmp.eq.s32.totalorder %s23, 1
      %p132 = por %p130, %p131
      %p133 = scmp.ne.s32.totalorder %s124, %s125
      %p134 = scmp.eq.s32.totalorder %s23, 0
      %p135 = por %p133, %p134
      %p136 = scmp.ne.s32.totalorder %s124, %s125
      %p137 = scmp.eq.s32.totalorder %s24, 1
      %p138 = por %p136, %p137
      %p140 = scmp.ne.s32.totalorder %s125, %s139
      %p141 = scmp.eq.s32.totalorder %s24, 0
      %p142 = por %p140, %p141
      %s144 = sadd.s32 %s143, 1
      %p147 = scmp.eq.s32.totalorder %s18, 1
      %p148 = scmp.ne.s32.totalorder %s143, %s145
      %p149 = scmp.eq.s32.totalorder %s18, 0
      %p150 = por %p148, %p149
      %p151 = scmp.ne.s32.totalorder %s143, %s145
      %p152 = scmp.eq.s32.totalorder %s23, 1
      %p153 = por %p151, %p152
      %p154 = scmp.ne.s32.totalorder %s145, %s146
      %p155 = scmp.eq.s32.totalorder %s23, 0
      %p156 = por %p154, %p155
      %p157 = scmp.ne.s32.totalorder %s145, %s146
      %p158 = scmp.eq.s32.totalorder %s24, 1
      %p159 = por %p157, %p158
      %p161 = scmp.ne.s32.totalorder %s146, %s160
      %p162 = scmp.eq.s32.totalorder %s24, 0
      %p163 = por %p161, %p162
      %s164 = ssub.s32 %s25, %s44
      %p165 = scmp.eq.s32.totalorder %s164, 0
      %s167 = sadd.s32 %s166, 1
      %s168 = scalar_select %p165, %s166, %s167
      %p171 = pneg %p165
      %p172 = scmp.eq.s32.totalorder %s18, 1
      %p173 = por %p171, %p172
      %p174 = scmp.ne.s32.totalorder %s166, %s169
      %p175 = scmp.eq.s32.totalorder %s18, 0
      %p176 = por %p174, %p175
      %p177 = scmp.ne.s32.totalorder %s166, %s169
      %p178 = scmp.eq.s32.totalorder %s23, 1
      %p179 = por %p177, %p178
      %p180 = scmp.ne.s32.totalorder %s169, %s170
      %p181 = scmp.eq.s32.totalorder %s23, 0
      %p182 = por %p180, %p181
      %p183 = scmp.ne.s32.totalorder %s169, %s170
      %p184 = scmp.eq.s32.totalorder %s24, 1
      %p185 = por %p183, %p184
      %p187 = scmp.ne.s32.totalorder %s170, %s186
      %p188 = scmp.eq.s32.totalorder %s24, 0
      %p189 = por %p187, %p188
      %p190 = scmp.le.s32.totalorder 1, %s18
      %p191 = scmp.lt.s32.totalorder %s18, 3
      %p192 = pnand %p190, %p191
      %p193 = pneg %p192
      // Predicated region
      $region9: #{tpu_custom_call.1} parent=5 // pred_check
        _
      $region10: #{tpu_custom_call.1} parent=5 // pred_check_branch
        %195 = sbr.rel (%p192) target = $region12
      $region11: #{tpu_custom_call.1} parent=5 // pred_region
        %s196 = ssub.s32 %s18, 1
        // Predicated region
        $region13: #{tpu_custom_call.1} parent=11 // pred_check
          %p197 = pneg %p93
        $region14: #{tpu_custom_call.1} parent=11 // pred_check_branch
          %199 = sbr.rel (%p197) target = $region16
        $region15: #{tpu_custom_call.1} parent=11 // pred_region
          %s200 = smul.u32 4, %s30
          %s202 = ssub.s32 512, 512
          %203 = vsyncadd [#allocation7], %s202
          %s204 = sadd.s32 %s29, %s200
          %s205 = smul.addr %s204, 128
          %s206 = scalar_lea.hbm %s1, %s205
          %s207 = sshll.u32 [#allocation6], 4
          %s208 = int_to_ptr.vmem [resolvable:$true] %s207
          %213 = dma.hbm_to_vmem [thread:$0]  %s206, 512, %s208, [#allocation7], 128, 128, 8
        $region16: #{tpu_custom_call.1} parent=11 // pred_fallthru
          _
        // Predicated region
        $region17: #{tpu_custom_call.1} parent=11 // pred_check
          %p214 = pneg %p114
        $region18: #{tpu_custom_call.1} parent=11 // pred_check_branch
          %216 = sbr.rel (%p214) target = $region20
        $region19: #{tpu_custom_call.1} parent=11 // pred_region
          _
        $region20: #{tpu_custom_call.1} parent=11 // pred_fallthru
          _
        // Predicated region
        $region21: #{tpu_custom_call.1} parent=11 // pred_check
          %p217 = pneg %p135
        $region22: #{tpu_custom_call.1} parent=11 // pred_check_branch
          %219 = sbr.rel (%p217) target = $region24
        $region23: #{tpu_custom_call.1} parent=11 // pred_region
          _
        $region24: #{tpu_custom_call.1} parent=11 // pred_fallthru
          _
        // Predicated region
        $region25: #{tpu_custom_call.1} parent=11 // pred_check
          %p220 = pneg %p156
        $region26: #{tpu_custom_call.1} parent=11 // pred_check_branch
          %222 = sbr.rel (%p220) target = $region28
        $region27: #{tpu_custom_call.1} parent=11 // pred_region
          _
        $region28: #{tpu_custom_call.1} parent=11 // pred_fallthru
          _
      $region12: #{tpu_custom_call.1} parent=5 // pred_fallthru
        _
      %p223 = scmp.lt.s32.totalorder %s18, 2
      // Predicated region
      $region29: #{tpu_custom_call.1} parent=5 // pred_check
        %p224 = pneg %p223
      $region30: #{tpu_custom_call.1} parent=5 // pred_check_branch
        %226 = sbr.rel (%p224) target = $region32
      $region31: #{tpu_custom_call.1} parent=5 // pred_region
        // Predicated region
        $region33: #{tpu_custom_call.1} parent=31 // pred_check
          %p227 = pneg %p59
        $region34: #{tpu_custom_call.1} parent=31 // pred_check_branch
          %229 = sbr.rel (%p227) target = $region36
        $region35: #{tpu_custom_call.1} parent=31 // pred_region
          %s230 = sand.u32 %s49, 1
          %s231 = scalar_lea.sflag [#allocation4], %s230
          %s232 = sand.u32 %s49, 1
          %s233 = smul.addr %s232, 8
          %s234 = scalar_lea.vmem [#allocation3], %s233
          %s236 = ssub.s32 128, 128
          %237 = vsyncadd %s231, %s236
          %s238 = sadd.s32 %s26, %s25
          %s239 = smul.addr %s238, 128
          %s240 = scalar_lea.hbm %s0, %s239
          %s242 = sshll.u32 %s234, 4
          %s243 = int_to_ptr.vmem [resolvable:$true] %s242
          %245 = dma.hbm_to_vmem [thread:$0]  %s240, 128, %s243, %s231
        $region36: #{tpu_custom_call.1} parent=31 // pred_fallthru
          _
      $region32: #{tpu_custom_call.1} parent=5 // pred_fallthru
        _
      %p246 = scmp.le.s32.totalorder 1, %s18
      %p247 = scmp.lt.s32.totalorder %s18, 3
      %p248 = pnand %p246, %p247
      %p249 = pneg %p248
      // Predicated region
      $region37: #{tpu_custom_call.1} parent=5 // pred_check
        _
      $region38: #{tpu_custom_call.1} parent=5 // pred_check_branch
        %251 = sbr.rel (%p248) target = $region40
      $region39: #{tpu_custom_call.1} parent=5 // pred_region
        %s252 = ssub.s32 %s18, 1
        %s253 = sand.u32 %s52, 1
        %s254 = scalar_lea.sflag [#allocation4], %s253
        %s255 = sand.u32 %s52, 1
        %s256 = smul.addr %s255, 8
        %s257 = scalar_lea.vmem [#allocation3], %s256
        // Predicated region
        $region41: #{tpu_custom_call.1} parent=39 // pred_check
          %p258 = pneg %p65
        $region42: #{tpu_custom_call.1} parent=39 // pred_check_branch
          %260 = sbr.rel (%p258) target = $region44
        $region43: #{tpu_custom_call.1} parent=39 // pred_region
          %261 = dma.done %s254, 128
        $region44: #{tpu_custom_call.1} parent=39 // pred_fallthru
          _
        // Predicated region
        $region45: #{tpu_custom_call.1} parent=39 // pred_check
          %p262 = pneg %p93
        $region46: #{tpu_custom_call.1} parent=39 // pred_check_branch
          %264 = sbr.rel (%p262) target = $region48
        $region47: #{tpu_custom_call.1} parent=39 // pred_region
          %265 = dma.done [#allocation7], 512
        $region48: #{tpu_custom_call.1} parent=39 // pred_fallthru
          _
        %s266 = sand.u32 %s52, 1
        %s267 = scalar_lea.sflag [#allocation4], %s266
        %s268 = sand.u32 %s52, 1
        %s269 = smul.addr %s268, 8
        %s270 = scalar_lea.vmem [#allocation3], %s269
        %p271 = pneg %p65
        %p272 = pneg %p62
        %p273 = pneg %p93
        %p274 = pneg %p90
        %p275 = pneg %p114
        %p276 = pneg %p111
        %p277 = pneg %p135
        %p278 = pneg %p132
        %p279 = pneg %p156
        %p280 = pneg %p153
        %p281 = pneg %p182
        %p282 = pneg %p179
        %s283 = sand.u32 %s169, 1
        %s284 = scalar_lea.sflag [#allocation5], %s283
        %s285 = sand.u32 %s169, 1
        %s286 = smul.addr %s285, 8
        %s287 = scalar_lea.vmem [#allocation8], %s286
        %s288 = smul.u32 4, %s30
        %p289 = scmp.eq.s32.totalorder %s29, 0
        %p290 = scmp.eq.s32.totalorder %s30, 0
        %p291 = pnand %p289, %p290
        %p292 = pneg %p291
        // Predicated region
        $region49: #{tpu_custom_call.1} parent=39 // pred_check
          _
        $region50: #{tpu_custom_call.1} parent=39 // pred_check_branch
          %294 = sbr.rel (%p291) target = $region52
        $region51: #{tpu_custom_call.1} parent=39 // pred_region
          %vm295 = vcmask 261120
          %296 = vst.msk [vmem:[#allocation2] sm:$0xff] %vm295, 0.0
        $region52: #{tpu_custom_call.1} parent=39 // pred_fallthru
          _
        %v297 = vld [vmem:[%s257] sm:$0xff]
        %v298 = vld [vmem:[#allocation6] sm:$0xff]
        %v299 = vld [vmem:[#allocation6 + $0x8] sm:$0xff]
        %v300 = vld [vmem:[#allocation6 + $0x10] sm:$0xff]
        %v301 = vld [vmem:[#allocation6 + $0x18] sm:$0xff]
        %vm302 = vcmask 261120
        %v304 = vsel %vm302, %v297, 0
        %v307 = vsel %vm302, %v298, 0
        %v310 = vsel %vm302, %v299, 0
        %v313 = vsel %vm302, %v300, 0
        %v316 = vsel %vm302, %v301, 0
        %318 = vmatprep.subr.mxu0 0.0
        %319 = vmatpush1.xpose.msra.mxu0 %v307
        %320 = vmatprep.subr.mxu0 0.0
        %321 = vmatpush1.xpose.msra.mxu0 %v310
        %322 = vmatprep.subr.mxu0 0.0
        %323 = vmatpush1.xpose.msra.mxu0 %v313
        %324 = vmatprep.subr.mxu0 0.0
        %325 = vmatpush1.xpose.msra.mxu0 %v316
        %326 = vmatprep.subr.mxu0 0.0
        %327 = vmatpush1.xpose.msra.mxu0 0.0
        %328 = vmatprep.subr.mxu0 0.0
        %329 = vmatpush1.xpose.msra.mxu0 0.0
        %330 = vmatprep.subr.mxu0 0.0
        %331 = vmatpush1.xpose.msra.mxu0 0.0
        %332 = vmatprep.subr.mxu0 0.0
        %333 = vmatpush1.xpose.msra.mxu0 0.0
        %334 = vmatprep.subr.mxu0 0.0
        %335 = vmatpush1.xpose.msra.mxu0 0.0
        %336 = vmatprep.subr.mxu0 0.0
        %337 = vmatpush1.xpose.msra.mxu0 0.0
        %338 = vmatprep.subr.mxu0 0.0
        %339 = vmatpush1.xpose.msra.mxu0 0.0
        %340 = vmatprep.subr.mxu0 0.0
        %341 = vmatpush1.xpose.msra.mxu0 0.0
        %342 = vmatprep.subr.mxu0 0.0
        %343 = vmatpush1.xpose.msra.mxu0 0.0
        %344 = vmatprep.subr.mxu0 0.0
        %345 = vmatpush1.xpose.msra.mxu0 0.0
        %346 = vmatprep.subr.mxu0 0.0
        %347 = vmatpush1.xpose.msra.mxu0 0.0
        %348 = vmatprep.subr.mxu0 0.0
        %349 = vmatpush1.xpose.msra.mxu0 0.0
        %350 = vmatprep.subr.mxu0 0.0
        %351 = vmatpush1.xpose.msra.mxu0 0.0
        %352 = vmatprep.subr.mxu0 0.0
        %353 = vmatpush1.xpose.msra.mxu0 0.0
        %354 = vmatprep.subr.mxu0 0.0
        %355 = vmatpush1.xpose.msra.mxu0 0.0
        %356 = vmatprep.subr.mxu0 0.0
        %357 = vmatpush1.xpose.msra.mxu0 0.0
        %358 = vmatprep.subr.mxu0 0.0
        %359 = vmatpush1.xpose.msra.mxu0 0.0
        %360 = vmatprep.subr.mxu0 0.0
        %361 = vmatpush1.xpose.msra.mxu0 0.0
        %362 = vmatprep.subr.mxu0 0.0
        %363 = vmatpush1.xpose.msra.mxu0 0.0
        %364 = vmatprep.subr.mxu0 0.0
        %365 = vmatpush1.xpose.msra.mxu0 0.0
        %366 = vmatprep.subr.mxu0 0.0
        %367 = vmatpush1.xpose.msra.mxu0 0.0
        %368 = vmatprep.subr.mxu0 0.0
        %369 = vmatpush1.xpose.msra.mxu0 0.0
        %370 = vmatprep.subr.mxu0 0.0
        %371 = vmatpush1.xpose.msra.mxu0 0.0
        %372 = vmatprep.subr.mxu0 0.0
        %373 = vmatpush1.xpose.msra.mxu0 0.0
        %374 = vmatprep.subr.mxu0 0.0
        %375 = vmatpush1.xpose.msra.mxu0 0.0
        %376 = vmatprep.subr.mxu0 0.0
        %377 = vmatpush1.xpose.msra.mxu0 0.0
        %378 = vmatprep.subr.mxu0 0.0
        %379 = vmatpush1.xpose.msra.mxu0 0.0
        %380 = vmatprep.subr.mxu0 0.0
        %381 = vmatpush1.xpose.msra.mxu0 0.0
        %382 = vmatprep.mubr.f32.mxu0 0.0
        %383 = vmatmul.mubr.f32.gmra.mrb[0].mxu0 %v304
        %v384 = vpop.f32.mrb[0].mxu0
        %v385 = vadd.f32 0.0, %v384
        %v386 = vpop.f32.mrb[0].mxu0
        %387 = vdwg.mxu0
        %v388 = vld [vmem:[#allocation2] sm:$0xff]
        %v389 = vadd.f32 %v388, %v385
        %390 = vst.msk [vmem:[#allocation2] sm:$0xff] %vm302, %v389
        // Predicated region
        $region53: #{tpu_custom_call.1} parent=39 // pred_check
          _
        $region54: #{tpu_custom_call.1} parent=39 // pred_check_branch
          %392 = sbr.rel (%p291) target = $region56
        $region55: #{tpu_custom_call.1} parent=39 // pred_region
          %v393 = vld [vmem:[#allocation2] sm:$0xff]
          %v394 = vld [vmem:[%s2] sm:$0x1]
          %v396 = vlaneseq
          %v397 = vshrl.u32 %v396, 7
          %v398 = vsub.s32 0, %v397
          %v399 = vrot.slane %v394, %v398
          %v401 = vadd.f32 %v393, %v399
          %v402 = vmul.f32 %v401, 0.5
          %v403 = vmul.f32 %v401, 0.044715
          %v404 = vmul.f32 %v403, %v401
          %v405 = vmul.f32 %v404, %v401
          %v406 = vadd.f32 %v401, %v405
          %v407 = vmul.f32 %v406, 0.7978846
          %v408 = vtanh.pop %v407
          %v409 = vadd.f32 %v408, 1.0
          %v410 = vmul.f32 %v402, %v409
          %v411 = vsel %vm302, %v410, 0.0
          %412 = vadd.xlane.f32.xlu0 %v411
          %v413 = vpop.xlane.xlu0 %412
          %v414 = vmul.f32 %v413, 0.03125
          %v415 = vmul.f32 %v410, %v410
          %v416 = vsel %vm302, %v415, 0.0
          %417 = vadd.xlane.f32.xlu0 %v416
          %v418 = vpop.xlane.xlu0 %417
          %v419 = vmul.f32 %v418, 0.03125
          %v420 = vmul.f32 %v414, %v414
          %v421 = vsub.f32 %v419, %v420
          %v422 = vmax.f32 %v421, 0.0
          %v423 = vadd.f32 %v422, 1e-12
          %v424 = vrsqrt.pop %v423
          %v425 = vsub.f32 %v410, %v414
          %v426 = vld [vmem:[%s3] sm:$0x1]
          %v428 = vlaneseq
          %v429 = vshrl.u32 %v428, 7
          %v430 = vsub.s32 0, %v429
          %v431 = vrot.slane %v426, %v430
          %v433 = vmul.f32 %v424, %v431
          %v434 = vmul.f32 %v425, %v433
          %v435 = vld [vmem:[%s4] sm:$0x1]
          %v437 = vlaneseq
          %v438 = vshrl.u32 %v437, 7
          %v439 = vsub.s32 0, %v438
          %v440 = vrot.slane %v435, %v439
          %v442 = vadd.f32 %v434, %v440
          %443 = vst.msk [vmem:[%s287] sm:$0xff] %vm302, %v442
        $region56: #{tpu_custom_call.1} parent=39 // pred_fallthru
          _
        %s444 = sand.u32 %s169, 1
        %s445 = scalar_lea.sflag [#allocation5], %s444
        %s446 = sand.u32 %s169, 1
        %s447 = smul.addr %s446, 8
        %s448 = scalar_lea.vmem [#allocation8], %s447
        // Predicated region
        $region57: #{tpu_custom_call.1} parent=39 // pred_check
          %p449 = pneg %p179
        $region58: #{tpu_custom_call.1} parent=39 // pred_check_branch
          %451 = sbr.rel (%p449) target = $region60
        $region59: #{tpu_custom_call.1} parent=39 // pred_region
          %s453 = ssub.s32 128, 128
          %454 = vsyncadd %s445, %s453
          %s455 = smul.addr %s28, 128
          %s456 = scalar_lea.hbm %s5, %s455
          %s458 = sshll.u32 %s448, 4
          %s459 = int_to_ptr.vmem [resolvable:$true] %s458
          %461 = dma.vmem_to_hbm [thread:$0]  %s459, 128, %s456, %s445
        $region60: #{tpu_custom_call.1} parent=39 // pred_fallthru
          _
      $region40: #{tpu_custom_call.1} parent=5 // pred_fallthru
        _
      %p462 = scmp.le.s32.totalorder 2, %s18
      // Predicated region
      $region61: #{tpu_custom_call.1} parent=5 // pred_check
        %p463 = pneg %p462
      $region62: #{tpu_custom_call.1} parent=5 // pred_check_branch
        %465 = sbr.rel (%p463) target = $region64
      $region63: #{tpu_custom_call.1} parent=5 // pred_region
        %s466 = ssub.s32 %s18, 2
        // Predicated region
        $region65: #{tpu_custom_call.1} parent=63 // pred_check
          %p467 = pneg %p185
        $region66: #{tpu_custom_call.1} parent=63 // pred_check_branch
          %469 = sbr.rel (%p467) target = $region68
        $region67: #{tpu_custom_call.1} parent=63 // pred_region
          %s470 = sand.u32 %s170, 1
          %s471 = scalar_lea.sflag [#allocation5], %s470
          %s472 = sand.u32 %s170, 1
          %s473 = smul.addr %s472, 8
          %s474 = scalar_lea.vmem [#allocation8], %s473
          %475 = dma.done %s471, 128
        $region68: #{tpu_custom_call.1} parent=63 // pred_fallthru
          _
      $region64: #{tpu_custom_call.1} parent=5 // pred_fallthru
        _
    $region6: #{tpu_custom_call.1} parent=1 // loop_footer
      %s22 = sadd.s32 1, %s18
    $region7: #{tpu_custom_call.1} parent=1 // loop_footer_branch
      %17 = sbr.rel target = $region3
    $region8: #{tpu_custom_call.1} parent=1 // loop_exit
      _
    %476 = vsyncpa [#allocation4], 1
    %s477 = scalar_lea.sflag [#allocation4], 1
    %478 = vsyncpa %s477, 1
    %479 = vsyncpa [#allocation7], 1
    %480 = vsyncpa [#allocation5], 1
    %s481 = scalar_lea.sflag [#allocation5], 1
    %482 = vsyncpa %s481, 1

</llo_original>
